<compile_context>
chip_gen: v7x
topology: tpu7x:2x2x1
jax: 0.10.0
libtpu: 0.0.40
codegen_flags: <defaults>
</compile_context>

<pallas_src>
import math
import functools

import jax
import jax.numpy as jnp
from jax import lax
from jax.experimental import pallas as pl
from jax.experimental.pallas import tpu as pltpu


# Finite "minus infinity" used on the online-softmax (flash) path: keeps the
# running-max carry free of inf-inf NaNs while still underflowing exp() to 0.
_MASK_NEG = -1e30


# --------------------------------------------------------------------------
# Kernels
# --------------------------------------------------------------------------
def _attn_full_kernel(inv_scale, mask_mode, return_probs, compute_dtype, *refs):
    """One (batch*head, q-tile) step; softmax over the full Lk row."""
    it = iter(refs)
    q_ref = next(it)
    k_ref = next(it)
    v_ref = next(it)
    m_ref = next(it) if mask_mode == "stream" else None
    out_ref = next(it)
    probs_ref = next(it) if return_probs else None

    q = q_ref[0]                                   # (TQ, D)
    k = k_ref[0]                                   # (Lk, D)
    v = v_ref[0]                                   # (Lk, Dv)
    if compute_dtype is not None:
        q = q.astype(compute_dtype)
        k = k.astype(compute_dtype)
    # Fold 1/scale into Q (weak-typed python float keeps q's dtype).
    q = q * inv_scale

    # score = Q @ K^T : contract the D axis of both operands (no K transpose).
    s = lax.dot_general(q, k, (((1,), (1,)), ((), ())),
                        preferred_element_type=jnp.float32)    # (TQ, Lk) f32

    tq, lk = s.shape
    if mask_mode == "stream":
        # Direct int8 compare, no int32 widening; -inf matches torch semantics
        # (fully-masked rows -> NaN probs, as in PyTorch).
        s = jnp.where(m_ref[0] != 0, s, -jnp.inf)
    elif mask_mode == "causal":
        row = pl.program_id(1) * tq + lax.broadcasted_iota(jnp.int32, (tq, lk), 0)
        col = lax.broadcasted_iota(jnp.int32, (tq, lk), 1)
        s = jnp.where(row >= col, s, -jnp.inf)

    # Numerically stable softmax over the full row (exact per q-tile).
    row_max = jnp.max(s, axis=-1, keepdims=True)
    e = jnp.exp(s - row_max)
    denom = jnp.sum(e, axis=-1, keepdims=True)
    # Exact reciprocal when probs are returned (PyTorch parity); the EUP
    # approximate reciprocal is reserved for the output-only path.
    probs = e * pl.reciprocal(denom, approx=not return_probs)

    pv_dtype = v.dtype if compute_dtype is None else compute_dtype
    out = lax.dot_general(probs.astype(pv_dtype), v.astype(pv_dtype),
                          (((1,), (0,)), ((), ())),
                          preferred_element_type=jnp.float32)   # (TQ, Dv) f32

    # output = dropout(probs) @ V   (eval-mode dropout == identity)
    out_ref[0] = out.astype(out_ref.dtype)
    if return_probs:
        probs_ref[0] = probs.astype(probs_ref.dtype)


def _attn_flash_kernel(inv_scale, mask_mode, compute_dtype, *refs):
    """Online-softmax step over one (batch*head, q-tile, k-tile)."""
    it = iter(refs)
    q_ref = next(it)
    k_ref = next(it)
    v_ref = next(it)
    m_ref = next(it) if mask_mode == "stream" else None
    out_ref = next(it)
    m_sc = next(it)      # (TQ, 1) running max
    l_sc = next(it)      # (TQ, 1) running denom
    acc_sc = next(it)    # (TQ, Dv) running numerator

    ki = pl.program_id(2)

    @pl.when(ki == 0)
    def _():
        m_sc[...] = jnp.full_like(m_sc, -jnp.inf)
        l_sc[...] = jnp.zeros_like(l_sc)
        acc_sc[...] = jnp.zeros_like(acc_sc)

    q = q_ref[0]
    k = k_ref[0]
    v = v_ref[0]
    if compute_dtype is not None:
        q = q.astype(compute_dtype)
        k = k.astype(compute_dtype)
    q = q * inv_scale

    s = lax.dot_general(q, k, (((1,), (1,)), ((), ())),
                        preferred_element_type=jnp.float32)    # (TQ, TK) f32

    tq, tk = s.shape
    if mask_mode == "stream":
        s = jnp.where(m_ref[0] != 0, s, _MASK_NEG)
    elif mask_mode == "causal":
        row = pl.program_id(1) * tq + lax.broadcasted_iota(jnp.int32, (tq, tk), 0)
        col = ki * tk + lax.broadcasted_iota(jnp.int32, (tq, tk), 1)
        s = jnp.where(row >= col, s, _MASK_NEG)

    m_prev = m_sc[...]
    m_new = jnp.maximum(m_prev, jnp.max(s, axis=-1, keepdims=True))
    alpha = jnp.exp(m_prev - m_new)
    p = jnp.exp(s - m_new)
    l_sc[...] = alpha * l_sc[...] + jnp.sum(p, axis=-1, keepdims=True)
    pv_dtype = v.dtype if compute_dtype is None else compute_dtype
    acc_sc[...] = alpha * acc_sc[...] + lax.dot_general(
        p.astype(pv_dtype), v.astype(pv_dtype), (((1,), (0,)), ((), ())),
        preferred_element_type=jnp.float32)
    m_sc[...] = m_new

    @pl.when(ki == pl.num_programs(2) - 1)
    def _():
        out_ref[0] = (acc_sc[...] *
                      pl.reciprocal(l_sc[...], approx=True)).astype(out_ref.dtype)


# --------------------------------------------------------------------------
# Tiling helpers
# --------------------------------------------------------------------------
def _sublane_multiple(itemsize):
    # (8, 128) is the f32 tile; sub-32-bit dtypes pack along sublanes:
    # bf16 -> 16, int8 -> 32.
    return max(8, 32 // int(itemsize))


def _vmem_budget():
    """(vmem_limit_bytes, planning_budget_bytes) derived from the chip."""
    try:
        cap = int(pltpu.get_tpu_info().vmem_capacity_bytes)
    except Exception:
        cap = 64 * 1024 * 1024                 # conservative (v7x-sized) fallback
    limit = (int(cap * 0.78) >> 20) << 20      # ~100 MiB on 128 MiB parts, ~50 MiB v7x
    budget = limit - (4 << 20)                 # headroom for compiler scratch
    return limit, budget


def _pick_q_tile_full(Lq, Lk, D, Dv, q_isize, out_isize, probs_isize,
                      mask_streamed, budget):
    """Largest q-tile (and K/V buffer count) whose *full* footprint fits."""
    req = max(_sublane_multiple(q_isize), _sublane_multiple(out_isize))
    if probs_isize:
        req = max(req, _sublane_multiple(probs_isize))
    if mask_streamed:
        req = max(req, 32)                     # int8 mask tile: TQ is its sublane dim

    def footprint(tq, kv_bufs):
        fp = 2 * tq * D * q_isize                    # q tile (double-buffered)
        fp += kv_bufs * Lk * (D + Dv) * q_isize      # k + v blocks
        fp += 2 * tq * Dv * out_isize                # out tile
        if mask_streamed:
            fp += 2 * tq * Lk                        # int8 mask tile
        if probs_isize:
            fp += 2 * tq * Lk * probs_isize          # probs output tile
        fp += 3 * tq * Lk * 4                        # live f32 score / exp / probs
        fp += 8 * tq * 4 + (1 << 20)                 # row stats + fudge
        return fp

    cands = {t for t in (1024, 512, 256, 128, 64, 32, 16, 8)
             if t < Lq and Lq % t == 0 and t % req == 0}
    cands.add(Lq)                                    # full-Lq block is always legal
    for kv_bufs in (2, 1):                           # prefer double-buffered K/V
        for tq in sorted(cands, reverse=True):
            if footprint(tq, kv_bufs) <= budget:
                return tq, kv_bufs
    return min(cands), 1                             # last resort


def _pick_tiles_flash(Lq, Lk, D, Dv, q_isize, out_isize, mask_streamed, budget):
    """(TQ, TK) for the online-softmax path."""
    req_q = max(_sublane_multiple(q_isize), _sublane_multiple(out_isize))
    if mask_streamed:
        req_q = max(req_q, 32)
    req_k = _sublane_multiple(q_isize)

    def footprint(tq, tk):
        fp = 2 * tq * D * q_isize                    # q
        fp += 2 * tk * (D + Dv) * q_isize            # k + v (double-buffered)
        fp += 2 * tq * Dv * out_isize                # out
        if mask_streamed:
            fp += 2 * tq * tk                        # int8 mask tile
        fp += 3 * tq * tk * 4                        # f32 s / p / temps
        fp += (tq * Dv + 2 * tq) * 4                 # acc / m / l scratch
        fp += (1 << 20)
        return fp

    tq_cands = {t for t in (256, 128, 64, 32, 16, 8)
                if t < Lq and Lq % t == 0 and t % req_q == 0}
    tq_cands.add(Lq)
    tk_cands = {t for t in (1024, 512, 256, 128)
                if t < Lk and Lk % t == 0 and t % req_k == 0
                and (not mask_streamed or t % 128 == 0)}   # mask lane-dim rule
    tk_cands.add(Lk)

    best = None
    for tq in sorted(tq_cands, reverse=True):
        for tk in sorted(tk_cands, reverse=True):
            if footprint(tq, tk) <= budget:
                if best is None or tq * tk > best[0] * best[1]:
                    best = (tq, tk)
                break
    if best is None:
        best = (min(tq_cands), min(tk_cands))
    return best


# --------------------------------------------------------------------------
# Public wrapper
# --------------------------------------------------------------------------
def scale_dot_product_attention(query, key, value, mask=None, *, scale,
                                dropout_rate=0.0, return_probs=True,
                                probs_dtype=None, compute_dtype=None):
    """Pallas TPU ScaleDotProductAttention.forward.

    query/key: [B, H, Lq, D] / [B, H, Lk, D]; value: [B, H, Lk, Dv].
    mask: None | "causal" (generated in-kernel, no mask HBM stream)
          | rank-2 [Lq, Lk] shared | rank-4 [B, H, Lq, Lk]; nonzero == keep.
    probs_dtype: dtype of returned attn_probs (default: query dtype).
    compute_dtype: optional bf16 MXU path for f32 inputs (f32 accumulation).
    Returns (output, attn_probs) if return_probs else output.
    """
    del dropout_rate  # eval-mode dropout == identity (see TODO at top)

    B, H, Lq, D = query.shape
    Lk = key.shape[2]
    Dv = value.shape[3]
    BH = B * H

    q = query.reshape(BH, Lq, D)
    k = key.reshape(BH, Lk, D)
    v = value.reshape(BH, Lk, Dv)

    out_dtype = query.dtype
    probs_dtype = out_dtype if probs_dtype is None else jnp.dtype(probs_dtype)
    q_isize = q.dtype.itemsize
    out_isize = jnp.dtype(out_dtype).itemsize
    probs_isize = jnp.dtype(probs_dtype).itemsize if return_probs else 0

    # ---- mask handling ----------------------------------------------------
    mask_mode, mask_arr, mask_shared = "none", None, True
    if isinstance(mask, str):
        if mask != "causal":
            raise ValueError(f"unknown mask string: {mask!r}")
        mask_mode = "causal"
    elif mask is not None:
        m = jnp.asarray(mask)
        mask_mode = "stream"
        if m.ndim == 2:
            mask_arr = (m != 0).astype(jnp.int8).reshape(1, Lq, Lk)
            mask_shared = True
        elif m.ndim == 4:
            mask_arr = (m != 0).astype(jnp.int8).reshape(BH, Lq, Lk)
            mask_shared = False
        else:
            raise ValueError("mask must be 'causal', rank-2 [Lq,Lk] or "
                             "rank-4 [B,H,Lq,Lk]")
    mask_streamed = mask_mode == "stream"

    vmem_limit, budget = _vmem_budget()
    inv_scale = 1.0 / float(scale)

    if return_probs:
        # ---- full-row softmax path (probs must be materialized anyway) ----
        TQ, kv_bufs = _pick_q_tile_full(Lq, Lk, D, Dv, q_isize, out_isize,
                                        probs_isize, mask_streamed, budget)
        grid = (BH, Lq // TQ)

        kv_kwargs = {}
        if kv_bufs == 1:
            # Single-buffer K/V when double-buffering does not fit (v7x / long
            # Lk): the exposed re-fetch is paid once per (b, h) and amortized
            # over Lq/TQ q-tiles.
            kv_kwargs["pipeline_mode"] = pl.Buffered(1)

        in_specs = [
            pl.BlockSpec((1, TQ, D), lambda bh, qi: (bh, qi, 0)),
            pl.BlockSpec((1, Lk, D), lambda bh, qi: (bh, 0, 0), **kv_kwargs),
            pl.BlockSpec((1, Lk, Dv), lambda bh, qi: (bh, 0, 0), **kv_kwargs),
        ]
        inputs = [q, k, v]
        if mask_streamed:
            if mask_shared:
                in_specs.append(pl.BlockSpec((1, TQ, Lk),
                                             lambda bh, qi: (0, qi, 0)))
            else:
                in_specs.append(pl.BlockSpec((1, TQ, Lk),
                                             lambda bh, qi: (bh, qi, 0)))
            inputs.append(mask_arr)

        out_shapes = (jax.ShapeDtypeStruct((BH, Lq, Dv), out_dtype),
                      jax.ShapeDtypeStruct((BH, Lq, Lk), probs_dtype))
        out_specs = [pl.BlockSpec((1, TQ, Dv), lambda bh, qi: (bh, qi, 0)),
                     pl.BlockSpec((1, TQ, Lk), lambda bh, qi: (bh, qi, 0))]

        kernel = functools.partial(_attn_full_kernel, inv_scale, mask_mode,
                                   True, compute_dtype)
        out, probs = pl.pallas_call(
            kernel,
            out_shape=out_shapes,
            grid_spec=pltpu.PrefetchScalarGridSpec(
                num_scalar_prefetch=0, grid=grid,
                in_specs=in_specs, out_specs=out_specs),
            compiler_params=pltpu.CompilerParams(
                dimension_semantics=("parallel", "parallel"),
                vmem_limit_bytes=vmem_limit),
        )(*inputs)
        return out.reshape(B, H, Lq, Dv), probs.reshape(B, H, Lq, Lk)

    # ---- output-only fast path: flash-style online softmax over k-tiles ----
    TQ, TK = _pick_tiles_flash(Lq, Lk, D, Dv, q_isize, out_isize,
                               mask_streamed, budget)
    grid = (BH, Lq // TQ, Lk // TK)

    in_specs = [
        pl.BlockSpec((1, TQ, D), lambda bh, qi, ki: (bh, qi, 0)),
        pl.BlockSpec((1, TK, D), lambda bh, qi, ki: (bh, ki, 0)),
        pl.BlockSpec((1, TK, Dv), lambda bh, qi, ki: (bh, ki, 0)),
    ]
    inputs = [q, k, v]
    if mask_streamed:
        if mask_shared:
            in_specs.append(pl.BlockSpec((1, TQ, TK),
                                         lambda bh, qi, ki: (0, qi, ki)))
        else:
            in_specs.append(pl.BlockSpec((1, TQ, TK),
                                         lambda bh, qi, ki: (bh, qi, ki)))
        inputs.append(mask_arr)

    kernel = functools.partial(_attn_flash_kernel, inv_scale, mask_mode,
                               compute_dtype)
    out = pl.pallas_call(
        kernel,
        out_shape=jax.ShapeDtypeStruct((BH, Lq, Dv), out_dtype),
        grid_spec=pltpu.PrefetchScalarGridSpec(
            num_scalar_prefetch=0, grid=grid,
            in_specs=in_specs,
            out_specs=pl.BlockSpec((1, TQ, Dv), lambda bh, qi, ki: (bh, qi, 0)),
            scratch_shapes=[pltpu.VMEM((TQ, 1), jnp.float32),
                            pltpu.VMEM((TQ, 1), jnp.float32),
                            pltpu.VMEM((TQ, Dv), jnp.float32)]),
        compiler_params=pltpu.CompilerParams(
            dimension_semantics=("parallel", "parallel", "arbitrary"),
            vmem_limit_bytes=vmem_limit),
    )(*inputs)
    return out.reshape(B, H, Lq, Dv)


# --------------------------------------------------------------------------
# Reference & self-test
# --------------------------------------------------------------------------
def _reference(query, key, value, mask, scale):
    score = jnp.einsum("bhqd,bhkd->bhqk", query, key) / scale
    if mask is not None:
        m = jnp.asarray(mask)
        if m.ndim == 2:
            m = m[None, None]
        score = jnp.where(m != 0, score, -jnp.inf)
    probs = jax.nn.softmax(score, axis=-1)
    out = jnp.einsum("bhqk,bhkd->bhqd", probs, value)
    return out, probs


if __name__ == "__main__":
    B, H, L, D = 2, 2, 8, 32
    scale = math.sqrt(D)

    root = jax.random.PRNGKey(0)
    kq, kk, kv = jax.random.split(root, 3)
    query = jax.random.normal(kq, (B, H, L, D), dtype=jnp.float32)
    key_ = jax.random.normal(kk, (B, H, L, D), dtype=jnp.float32)
    value = jax.random.normal(kv, (B, H, L, D), dtype=jnp.float32)

    causal = jnp.tril(jnp.ones((L, L), dtype=jnp.int32))
    ref_out, ref_probs = _reference(query, key_, value, causal, scale)

    # 1) causal mask generated in-kernel (zero mask HBM traffic), full-row path.
    out1, probs1 = scale_dot_product_attention(query, key_, value, "causal",
                                               scale=scale, dropout_rate=0.1)
    # 2) explicit shared boolean mask streamed once as int8, full-row path.
    out2, probs2 = scale_dot_product_attention(query, key_, value, causal,
                                               scale=scale, dropout_rate=0.1)
    # 3) output-only fast path (flash-style online softmax, no probs writeback).
    out3 = scale_dot_product_attention(query, key_, value, "causal",
                                       scale=scale, return_probs=False)
    jax.block_until_ready((out1, probs1, out2, probs2, out3))

    assert jnp.allclose(probs1, ref_probs, atol=5e-3, rtol=5e-3), "probs mismatch (causal)"
    assert jnp.allclose(out1, ref_out, atol=5e-3, rtol=5e-3), "output mismatch (causal)"
    assert jnp.allclose(probs2, ref_probs, atol=5e-3, rtol=5e-3), "probs mismatch (stream)"
    assert jnp.allclose(out2, ref_out, atol=5e-3, rtol=5e-3), "output mismatch (stream)"
    assert jnp.allclose(out3, ref_out, atol=1e-2, rtol=1e-2), "output mismatch (flash)"

    print("KERNEL_OK")
</pallas_src>

<mosaic_0001>
module attributes {stable_mosaic.version = 11 : i64} {
  func.func @_attn_full_kernel(%arg0: i32, %arg1: i32, %arg2: memref<1x8x32xf32, #tpu.memory_space<vmem>>, %arg3: memref<1x8x32xf32, #tpu.memory_space<vmem>>, %arg4: memref<1x8x32xf32, #tpu.memory_space<vmem>>, %arg5: memref<1x8x32xf32, #tpu.memory_space<vmem>>, %arg6: memref<1x8x8xf32, #tpu.memory_space<vmem>>) attributes {dimension_semantics = [#tpu.dimension_semantics<parallel>, #tpu.dimension_semantics<parallel>], iteration_bounds = array<i64: 4, 1>, scalar_prefetch = 0 : i64, scratch_operands = 0 : i64, tpu.core_type = #tpu.core_type<tc>, window_params = [{transform_indices = @transform_0, window_bounds = array<i64: 1, 8, 32>}, {transform_indices = @transform_1, window_bounds = array<i64: 1, 8, 32>}, {transform_indices = @transform_2, window_bounds = array<i64: 1, 8, 32>}, {transform_indices = @transform_3, window_bounds = array<i64: 1, 8, 32>}, {transform_indices = @transform_4, window_bounds = array<i64: 1, 8, 8>}]} {
    %c0 = arith.constant 0 : index
    %c0_0 = arith.constant 0 : index
    %c0_1 = arith.constant 0 : index
    %0 = vector.load %arg2[%c0, %c0_0, %c0_1] : memref<1x8x32xf32, #tpu.memory_space<vmem>>, vector<1x8x32xf32>
    %1 = vector.shape_cast %0 : vector<1x8x32xf32> to vector<8x32xf32>
    %c0_2 = arith.constant 0 : index
    %c0_3 = arith.constant 0 : index
    %c0_4 = arith.constant 0 : index
    %2 = vector.load %arg3[%c0_2, %c0_3, %c0_4] : memref<1x8x32xf32, #tpu.memory_space<vmem>>, vector<1x8x32xf32>
    %3 = vector.shape_cast %2 : vector<1x8x32xf32> to vector<8x32xf32>
    %c0_5 = arith.constant 0 : index
    %c0_6 = arith.constant 0 : index
    %c0_7 = arith.constant 0 : index
    %4 = vector.load %arg4[%c0_5, %c0_6, %c0_7] : memref<1x8x32xf32, #tpu.memory_space<vmem>>, vector<1x8x32xf32>
    %5 = vector.shape_cast %4 : vector<1x8x32xf32> to vector<8x32xf32>
    %cst = arith.constant 0.176776692 : f32
    %6 = vector.broadcast %cst : f32 to vector<8x32xf32>
    %7 = arith.mulf %1, %6 : vector<8x32xf32>
    %cst_8 = arith.constant dense<0.000000e+00> : vector<8x8xf32>
    %8 = tpu.matmul %7, %3, %cst_8 {dimension_numbers = #tpu.dot_dimension_numbers<[1], [1], [0], [0], [0, 0, 1, 0], [], []>} : vector<8x32xf32>, vector<8x32xf32>, vector<8x8xf32> -> vector<8x8xf32>
    %c8_i32 = arith.constant 8 : i32
    %9 = arith.muli %arg1, %c8_i32 : i32
    %10 = tpu.iota {dimensions = array<i32: 0>} : vector<8x8xi32>
    %11 = vector.broadcast %9 : i32 to vector<8x8xi32>
    %12 = arith.addi %11, %10 : vector<8x8xi32>
    %13 = tpu.iota {dimensions = array<i32: 1>} : vector<8x8xi32>
    %14 = arith.cmpi sge, %12, %13 : vector<8x8xi32>
    %cst_9 = arith.constant 0xFF800000 : f32
    %15 = vector.broadcast %cst_9 : f32 to vector<8x8xf32>
    %16 = arith.select %14, %8, %15 : vector<8x8xi1>, vector<8x8xf32>
    %cst_10 = arith.constant dense<0xFF800000> : vector<8xf32>
    %17 = vector.multi_reduction <maximumf>, %16, %cst_10 [1] : vector<8x8xf32> to vector<8xf32>
    %18 = vector.shape_cast %17 : vector<8xf32> to vector<8x1xf32>
    %19 = vector.broadcast %18 : vector<8x1xf32> to vector<8x8xf32>
    %20 = arith.subf %16, %19 : vector<8x8xf32>
    %21 = math.exp %20 : vector<8x8xf32>
    %cst_11 = arith.constant dense<0.000000e+00> : vector<8xf32>
    %22 = vector.multi_reduction <add>, %21, %cst_11 [1] : vector<8x8xf32> to vector<8xf32>
    %23 = vector.shape_cast %22 : vector<8xf32> to vector<8x1xf32>
    %24 = tpu.reciprocal %23 : vector<8x1xf32> -> vector<8x1xf32>
    %25 = vector.broadcast %24 : vector<8x1xf32> to vector<8x8xf32>
    %26 = arith.mulf %21, %25 : vector<8x8xf32>
    %cst_12 = arith.constant dense<0.000000e+00> : vector<8x32xf32>
    %27 = tpu.matmul %26, %5, %cst_12 {dimension_numbers = #tpu.dot_dimension_numbers<[1], [0], [0], [1], [0, 0, 1, 1], [], []>} : vector<8x8xf32>, vector<8x32xf32>, vector<8x32xf32> -> vector<8x32xf32>
    %c0_13 = arith.constant 0 : index
    %c0_14 = arith.constant 0 : index
    %c0_15 = arith.constant 0 : index
    %28 = vector.load %arg5[%c0_13, %c0_14, %c0_15] : memref<1x8x32xf32, #tpu.memory_space<vmem>>, vector<1x8x32xf32>
    %29 = vector.shape_cast %28 : vector<1x8x32xf32> to vector<8x32xf32>
    %30 = vector.shape_cast %27 : vector<8x32xf32> to vector<1x8x32xf32>
    tpu.vector_store %arg5[%c0_13, %c0_14, %c0_15], %30 {strides = array<i32>} : memref<1x8x32xf32, #tpu.memory_space<vmem>>, vector<1x8x32xf32>,
    %c0_16 = arith.constant 0 : index
    %c0_17 = arith.constant 0 : index
    %c0_18 = arith.constant 0 : index
    %31 = vector.load %arg6[%c0_16, %c0_17, %c0_18] : memref<1x8x8xf32, #tpu.memory_space<vmem>>, vector<1x8x8xf32>
    %32 = vector.shape_cast %31 : vector<1x8x8xf32> to vector<8x8xf32>
    %33 = vector.shape_cast %26 : vector<8x8xf32> to vector<1x8x8xf32>
    tpu.vector_store %arg6[%c0_16, %c0_17, %c0_18], %33 {strides = array<i32>} : memref<1x8x8xf32, #tpu.memory_space<vmem>>, vector<1x8x8xf32>,
    return
  }
  func.func @transform_0(%arg0: i32, %arg1: i32) -> (i32, i32, i32) {
    %c0_i32 = arith.constant 0 : i32
    %c0_i32_0 = arith.constant 0 : i32
    return %arg0, %arg1, %c0_i32 : i32, i32, i32
  }
  func.func @transform_1(%arg0: i32, %arg1: i32) -> (i32, i32, i32) {
    %c0_i32 = arith.constant 0 : i32
    %c0_i32_0 = arith.constant 0 : i32
    %c0_i32_1 = arith.constant 0 : i32
    return %arg0, %c0_i32, %c0_i32_0 : i32, i32, i32
  }
  func.func @transform_2(%arg0: i32, %arg1: i32) -> (i32, i32, i32) {
    %c0_i32 = arith.constant 0 : i32
    %c0_i32_0 = arith.constant 0 : i32
    %c0_i32_1 = arith.constant 0 : i32
    return %arg0, %c0_i32, %c0_i32_0 : i32, i32, i32
  }
  func.func @transform_3(%arg0: i32, %arg1: i32) -> (i32, i32, i32) {
    %c0_i32 = arith.constant 0 : i32
    %c0_i32_0 = arith.constant 0 : i32
    return %arg0, %arg1, %c0_i32 : i32, i32, i32
  }
  func.func @transform_4(%arg0: i32, %arg1: i32) -> (i32, i32, i32) {
    %c0_i32 = arith.constant 0 : i32
    %c0_i32_0 = arith.constant 0 : i32
    return %arg0, %arg1, %c0_i32 : i32, i32, i32
  }
}

</mosaic_0001>

<llo_original>
// kernel: tpu_custom_call.1
$region0: #{tpu_custom_call.1}
  #allocation0 [shape = 'u32[]', space=smem, size = 0x4, offset = 0x4, fixed_abs, tag = 'smem constant byte address 0x4 - core index']
  #allocation1 [shape = 'u32[144,128]{1,0:T(1,128)}', space=vmem, size = 0x12000, scoped, tag = 'internal scratch']
  %s0 = inlined_call_operand.hbm [shape: f32[4,8,32], index: 0, kind: input, shape index: {}]
  %s1 = inlined_call_operand.hbm [shape: f32[4,8,32], index: 1, kind: input, shape index: {}]
  %s2 = inlined_call_operand.hbm [shape: f32[4,8,32], index: 2, kind: input, shape index: {}]
  %s3 = inlined_call_operand.hbm [shape: f32[4,8,32], index: 3, kind: output, shape index: {0}]
  %s4 = inlined_call_operand.hbm [shape: f32[4,8,8], index: 4, kind: output, shape index: {1}]
  %5 = xla_tuple %s3, %s4
  %s6 = sld [smem:[#allocation0]]
  $region65: #{tpu_custom_call.1} parent=0
    _
  %s8 = ssub.s32 1, %s6
  %s9 = scalar_select 0, %s8, %s6
  $region1: #{tpu_custom_call.1} parent=0
    #allocation2 [shape = 'u8[8192]{0}', space=vmem, size = 0x2000, scoped, tag = 'input window, operand 0']
    #allocation3 [shape = 's32[2]{0}', space=sflag, size = 0x8, scoped, tag = 'scoped memory for tpu_custom_call.1']
    #allocation4 [shape = 's32[2]{0}', space=sflag, size = 0x8, scoped, tag = 'scoped memory for tpu_custom_call.1']
    #allocation5 [shape = 'u8[8192]{0}', space=vmem, size = 0x2000, scoped, tag = 'input window, operand 1']
    #allocation6 [shape = 's32[2]{0}', space=sflag, size = 0x8, scoped, tag = 'scoped memory for tpu_custom_call.1']
    #allocation7 [shape = 'u8[8192]{0}', space=vmem, size = 0x2000, scoped, tag = 'input window, operand 2']
    #allocation8 [shape = 'u8[8192]{0}', space=vmem, size = 0x2000, scoped, tag = 'output window, operand 0']
    #allocation9 [shape = 'u8[8192]{0}', space=vmem, size = 0x2000, scoped, tag = 'output window, operand 1']
    #allocation10 [shape = 's32[2]{0}', space=sflag, size = 0x8, scoped, tag = 'scoped memory for tpu_custom_call.1']
    %10 = vsyncpa [#allocation3], 0
    %s11 = scalar_lea.sflag [#allocation3], 1
    %12 = vsyncpa %s11, 0
    %13 = vsyncpa [#allocation6], 0
    %s14 = scalar_lea.sflag [#allocation6], 1
    %15 = vsyncpa %s14, 0
    %16 = vsyncpa [#allocation4], 0
    %s17 = scalar_lea.sflag [#allocation4], 1
    %18 = vsyncpa %s17, 0
    %19 = vsyncpa [#allocation10], 0
    %s20 = scalar_lea.sflag [#allocation10], 1
    %21 = vsyncpa %s20, 0
    loop: start=0, step=1, limit=6
    $region2: #{tpu_custom_call.1} parent=1 // loop_pre_header
      _
    $region3: #{tpu_custom_call.1} parent=1 // loop_header
      %s23 = sphi 0, %s27
      %p24 = scmp.ge.s32.totalorder %s23, 6
      %s30 = sphi 0, %s42
      %s31 = sphi 0, %s38
      %s32 = sphi 0, %s30
      %s33 = sphi 0, %s31
      %s34 = sphi 0, %s32
      %s35 = sphi 0, %s33
      %s47 = sphi 0, %s49
      %s50 = sphi 0, %s47
      %s51 = sphi 0, %s50
      %s67 = sphi 0, %s51
      %s73 = sphi 0, %s75
      %s76 = sphi 0, %s73
      %s77 = sphi 0, %s76
      %s93 = sphi 0, %s77
      %s99 = sphi 0, %s101
      %s102 = sphi 0, %s99
      %s103 = sphi 0, %s102
      %s119 = sphi 0, %s103
      %s127 = sphi 0, %s129
      %s130 = sphi 0, %s127
      %s131 = sphi 0, %s130
      %s147 = sphi 0, %s131
      %s155 = sphi 0, %s157
      %s158 = sphi 0, %s155
      %s159 = sphi 0, %s158
      %s175 = sphi 0, %s159
    $region4: #{tpu_custom_call.1} parent=1 // loop_header_branch
      %26 = sbr.rel (%p24) target = $region8
    $region5: #{tpu_custom_call.1} parent=1 // loop_body
      %s28 = ssub.s32 %s23, 1
      %s29 = ssub.s32 %s23, 2
      %s36 = sadd.s32 1, %s31
      %p37 = scmp.ge.s32.totalorder %s36, 1
      %s38 = scalar_select %p37, 0, %s36
      %s39 = sadd.s32 1, %s30
      %s40 = scalar_select %p37, %s39, %s30
      %p41 = scmp.ge.s32.totalorder %s40, 4
      %s42 = scalar_select %p41, 0, %s40
      %s43 = ssub.s32 %s30, %s42
      %s44 = ssub.s32 %s31, %s38
      %s45 = sor.u32 %s43, %s44
      %p46 = scmp.eq.s32.totalorder %s45, 0
      %s48 = sadd.s32 %s47, 1
      %s49 = scalar_select %p46, %s47, %s48
      %p52 = pneg %p46
      %p53 = scmp.eq.s32.totalorder %s23, 3
      %p54 = por %p52, %p53
      %p55 = scmp.ne.s32.totalorder %s47, %s50
      %p56 = scmp.eq.s32.totalorder %s23, 0
      %p57 = por %p55, %p56
      %p58 = scmp.ne.s32.totalorder %s47, %s50
      %p59 = scmp.eq.s32.totalorder %s28, 3
      %p60 = por %p58, %p59
      %p61 = scmp.ne.s32.totalorder %s50, %s51
      %p62 = scmp.eq.s32.totalorder %s28, 0
      %p63 = por %p61, %p62
      %p64 = scmp.ne.s32.totalorder %s50, %s51
      %p65 = scmp.eq.s32.totalorder %s29, 3
      %p66 = por %p64, %p65
      %p68 = scmp.ne.s32.totalorder %s51, %s67
      %p69 = scmp.eq.s32.totalorder %s29, 0
      %p70 = por %p68, %p69
      %s71 = ssub.s32 %s30, %s42
      %p72 = scmp.eq.s32.totalorder %s71, 0
      %s74 = sadd.s32 %s73, 1
      %s75 = scalar_select %p72, %s73, %s74
      %p78 = pneg %p72
      %p79 = scmp.eq.s32.totalorder %s23, 3
      %p80 = por %p78, %p79
      %p81 = scmp.ne.s32.totalorder %s73, %s76
      %p82 = scmp.eq.s32.totalorder %s23, 0
      %p83 = por %p81, %p82
      %p84 = scmp.ne.s32.totalorder %s73, %s76
      %p85 = scmp.eq.s32.totalorder %s28, 3
      %p86 = por %p84, %p85
      %p87 = scmp.ne.s32.totalorder %s76, %s77
      %p88 = scmp.eq.s32.totalorder %s28, 0
      %p89 = por %p87, %p88
      %p90 = scmp.ne.s32.totalorder %s76, %s77
      %p91 = scmp.eq.s32.totalorder %s29, 3
      %p92 = por %p90, %p91
      %p94 = scmp.ne.s32.totalorder %s77, %s93
      %p95 = scmp.eq.s32.totalorder %s29, 0
      %p96 = por %p94, %p95
      %s97 = ssub.s32 %s30, %s42
      %p98 = scmp.eq.s32.totalorder %s97, 0
      %s100 = sadd.s32 %s99, 1
      %s101 = scalar_select %p98, %s99, %s100
      %p104 = pneg %p98
      %p105 = scmp.eq.s32.totalorder %s23, 3
      %p106 = por %p104, %p105
      %p107 = scmp.ne.s32.totalorder %s99, %s102
      %p108 = scmp.eq.s32.totalorder %s23, 0
      %p109 = por %p107, %p108
      %p110 = scmp.ne.s32.totalorder %s99, %s102
      %p111 = scmp.eq.s32.totalorder %s28, 3
      %p112 = por %p110, %p111
      %p113 = scmp.ne.s32.totalorder %s102, %s103
      %p114 = scmp.eq.s32.totalorder %s28, 0
      %p115 = por %p113, %p114
      %p116 = scmp.ne.s32.totalorder %s102, %s103
      %p117 = scmp.eq.s32.totalorder %s29, 3
      %p118 = por %p116, %p117
      %p120 = scmp.ne.s32.totalorder %s103, %s119
      %p121 = scmp.eq.s32.totalorder %s29, 0
      %p122 = por %p120, %p121
      %s123 = ssub.s32 %s30, %s42
      %s124 = ssub.s32 %s31, %s38
      %s125 = sor.u32 %s123, %s124
      %p126 = scmp.eq.s32.totalorder %s125, 0
      %s128 = sadd.s32 %s127, 1
      %s129 = scalar_select %p126, %s127, %s128
      %p132 = pneg %p126
      %p133 = scmp.eq.s32.totalorder %s23, 3
      %p134 = por %p132, %p133
      %p135 = scmp.ne.s32.totalorder %s127, %s130
      %p136 = scmp.eq.s32.totalorder %s23, 0
      %p137 = por %p135, %p136
      %p138 = scmp.ne.s32.totalorder %s127, %s130
      %p139 = scmp.eq.s32.totalorder %s28, 3
      %p140 = por %p138, %p139
      %p141 = scmp.ne.s32.totalorder %s130, %s131
      %p142 = scmp.eq.s32.totalorder %s28, 0
      %p143 = por %p141, %p142
      %p144 = scmp.ne.s32.totalorder %s130, %s131
      %p145 = scmp.eq.s32.totalorder %s29, 3
      %p146 = por %p144, %p145
      %p148 = scmp.ne.s32.totalorder %s131, %s147
      %p149 = scmp.eq.s32.totalorder %s29, 0
      %p150 = por %p148, %p149
      %s151 = ssub.s32 %s30, %s42
      %s152 = ssub.s32 %s31, %s38
      %s153 = sor.u32 %s151, %s152
      %p154 = scmp.eq.s32.totalorder %s153, 0
      %s156 = sadd.s32 %s155, 1
      %s157 = scalar_select %p154, %s155, %s156
      %p160 = pneg %p154
      %p161 = scmp.eq.s32.totalorder %s23, 3
      %p162 = por %p160, %p161
      %p163 = scmp.ne.s32.totalorder %s155, %s158
      %p164 = scmp.eq.s32.totalorder %s23, 0
      %p165 = por %p163, %p164
      %p166 = scmp.ne.s32.totalorder %s155, %s158
      %p167 = scmp.eq.s32.totalorder %s28, 3
      %p168 = por %p166, %p167
      %p169 = scmp.ne.s32.totalorder %s158, %s159
      %p170 = scmp.eq.s32.totalorder %s28, 0
      %p171 = por %p169, %p170
      %p172 = scmp.ne.s32.totalorder %s158, %s159
      %p173 = scmp.eq.s32.totalorder %s29, 3
      %p174 = por %p172, %p173
      %p176 = scmp.ne.s32.totalorder %s159, %s175
      %p177 = scmp.eq.s32.totalorder %s29, 0
      %p178 = por %p176, %p177
      %p179 = scmp.le.s32.totalorder 1, %s23
      %p180 = scmp.lt.s32.totalorder %s23, 5
      %p181 = pnand %p179, %p180
      %p182 = pneg %p181
      // Predicated region
      $region9: #{tpu_custom_call.1} parent=5 // pred_check
        _
      $region10: #{tpu_custom_call.1} parent=5 // pred_check_branch
        %184 = sbr.rel (%p181) target = $region12
      $region11: #{tpu_custom_call.1} parent=5 // pred_region
        %s185 = ssub.s32 %s23, 1
      $region12: #{tpu_custom_call.1} parent=5 // pred_fallthru
        _
      %p186 = scmp.lt.s32.totalorder %s23, 4
      // Predicated region
      $region13: #{tpu_custom_call.1} parent=5 // pred_check
        %p187 = pneg %p186
      $region14: #{tpu_custom_call.1} parent=5 // pred_check_branch
        %189 = sbr.rel (%p187) target = $region16
      $region15: #{tpu_custom_call.1} parent=5 // pred_region
        // Predicated region
        $region17: #{tpu_custom_call.1} parent=15 // pred_check
          %p190 = pneg %p57
        $region18: #{tpu_custom_call.1} parent=15 // pred_check_branch
          %192 = sbr.rel (%p190) target = $region20
        $region19: #{tpu_custom_call.1} parent=15 // pred_region
          %s193 = sand.u32 %s47, 1
          %s194 = scalar_lea.sflag [#allocation3], %s193
          %s195 = sand.u32 %s47, 1
          %s196 = smul.addr %s195, 8
          %s197 = scalar_lea.vmem [#allocation2], %s196
          %s199 = ssub.s32 128, 128
          %200 = vsyncadd %s194, %s199
          %s201 = sadd.s32 %s31, %s30
          %s202 = smul.addr %s201, 128
          %s203 = scalar_lea.hbm %s0, %s202
          %s205 = sshll.u32 %s197, 4
          %s206 = int_to_ptr.vmem [resolvable:$true] %s205
          %208 = dma.hbm_to_vmem [thread:$0]  %s203, 128, %s206, %s194
        $region20: #{tpu_custom_call.1} parent=15 // pred_fallthru
          _
        // Predicated region
        $region21: #{tpu_custom_call.1} parent=15 // pred_check
          %p209 = pneg %p83
        $region22: #{tpu_custom_call.1} parent=15 // pred_check_branch
          %211 = sbr.rel (%p209) target = $region24
        $region23: #{tpu_custom_call.1} parent=15 // pred_region
          %s212 = sand.u32 %s23, 1
          %s213 = scalar_lea.sflag [#allocation6], %s212
          %s214 = sand.u32 %s73, 1
          %s215 = smul.addr %s214, 8
          %s216 = scalar_lea.vmem [#allocation5], %s215
          %s218 = ssub.s32 128, 128
          %219 = vsyncadd %s213, %s218
          %s220 = smul.addr %s30, 128
          %s221 = scalar_lea.hbm %s1, %s220
          %s223 = sshll.u32 %s216, 4
          %s224 = int_to_ptr.vmem [resolvable:$true] %s223
          %226 = dma.hbm_to_vmem [thread:$0]  %s221, 128, %s224, %s213
        $region24: #{tpu_custom_call.1} parent=15 // pred_fallthru
          _
        // Predicated region
        $region25: #{tpu_custom_call.1} parent=15 // pred_check
          %p227 = pneg %p109
        $region26: #{tpu_custom_call.1} parent=15 // pred_check_branch
          %229 = sbr.rel (%p227) target = $region28
        $region27: #{tpu_custom_call.1} parent=15 // pred_region
          %s230 = sand.u32 %s23, 1
          %s231 = scalar_lea.sflag [#allocation6], %s230
          %s232 = sand.u32 %s99, 1
          %s233 = smul.addr %s232, 8
          %s234 = scalar_lea.vmem [#allocation7], %s233
          %s236 = ssub.s32 128, 128
          %237 = vsyncadd %s231, %s236
          %s238 = smul.addr %s30, 128
          %s239 = scalar_lea.hbm %s2, %s238
          %s241 = sshll.u32 %s234, 4
          %s242 = int_to_ptr.vmem [resolvable:$true] %s241
          %244 = dma.hbm_to_vmem [thread:$0]  %s239, 128, %s242, %s231
        $region28: #{tpu_custom_call.1} parent=15 // pred_fallthru
          _
      $region16: #{tpu_custom_call.1} parent=5 // pred_fallthru
        _
      %p245 = scmp.le.s32.totalorder 1, %s23
      %p246 = scmp.lt.s32.totalorder %s23, 5
      %p247 = pnand %p245, %p246
      %p248 = pneg %p247
      // Predicated region
      $region29: #{tpu_custom_call.1} parent=5 // pred_check
        _
      $region30: #{tpu_custom_call.1} parent=5 // pred_check_branch
        %250 = sbr.rel (%p247) target = $region32
      $region31: #{tpu_custom_call.1} parent=5 // pred_region
        %s251 = ssub.s32 %s23, 1
        %s252 = sand.u32 %s50, 1
        %s253 = scalar_lea.sflag [#allocation3], %s252
        %s254 = sand.u32 %s50, 1
        %s255 = smul.addr %s254, 8
        %s256 = scalar_lea.vmem [#allocation2], %s255
        // Predicated region
        $region33: #{tpu_custom_call.1} parent=31 // pred_check
          %p257 = pneg %p63
        $region34: #{tpu_custom_call.1} parent=31 // pred_check_branch
          %259 = sbr.rel (%p257) target = $region36
        $region35: #{tpu_custom_call.1} parent=31 // pred_region
          %260 = dma.done %s253, 128
        $region36: #{tpu_custom_call.1} parent=31 // pred_fallthru
          _
        %s261 = sand.u32 %s28, 1
        %s262 = scalar_lea.sflag [#allocation6], %s261
        %s263 = sand.u32 %s76, 1
        %s264 = smul.addr %s263, 8
        %s265 = scalar_lea.vmem [#allocation5], %s264
        // Predicated region
        $region37: #{tpu_custom_call.1} parent=31 // pred_check
          %p266 = pneg %p89
        $region38: #{tpu_custom_call.1} parent=31 // pred_check_branch
          %268 = sbr.rel (%p266) target = $region40
        $region39: #{tpu_custom_call.1} parent=31 // pred_region
          %269 = dma.done %s262, 128
        $region40: #{tpu_custom_call.1} parent=31 // pred_fallthru
          _
        %s270 = sand.u32 %s28, 1
        %s271 = scalar_lea.sflag [#allocation6], %s270
        %s272 = sand.u32 %s102, 1
        %s273 = smul.addr %s272, 8
        %s274 = scalar_lea.vmem [#allocation7], %s273
        // Predicated region
        $region41: #{tpu_custom_call.1} parent=31 // pred_check
          %p275 = pneg %p115
        $region42: #{tpu_custom_call.1} parent=31 // pred_check_branch
          %277 = sbr.rel (%p275) target = $region44
        $region43: #{tpu_custom_call.1} parent=31 // pred_region
          %278 = dma.done %s271, 128
        $region44: #{tpu_custom_call.1} parent=31 // pred_fallthru
          _
        %s279 = sand.u32 %s50, 1
        %s280 = scalar_lea.sflag [#allocation3], %s279
        %s281 = sand.u32 %s50, 1
        %s282 = smul.addr %s281, 8
        %s283 = scalar_lea.vmem [#allocation2], %s282
        %p284 = pneg %p63
        %p285 = pneg %p60
        %s286 = sand.u32 %s28, 1
        %s287 = scalar_lea.sflag [#allocation6], %s286
        %s288 = sand.u32 %s76, 1
        %s289 = smul.addr %s288, 8
        %s290 = scalar_lea.vmem [#allocation5], %s289
        %p291 = pneg %p89
        %p292 = pneg %p86
        %s293 = sand.u32 %s28, 1
        %s294 = scalar_lea.sflag [#allocation6], %s293
        %s295 = sand.u32 %s102, 1
        %s296 = smul.addr %s295, 8
        %s297 = scalar_lea.vmem [#allocation7], %s296
        %p298 = pneg %p115
        %p299 = pneg %p112
        %p300 = pneg %p143
        %p301 = pneg %p140
        %s302 = sand.u32 %s130, 1
        %s303 = scalar_lea.sflag [#allocation4], %s302
        %s304 = sand.u32 %s130, 1
        %s305 = smul.addr %s304, 8
        %s306 = scalar_lea.vmem [#allocation8], %s305
        %p307 = pneg %p171
        %p308 = pneg %p168
        %s309 = sand.u32 %s158, 1
        %s310 = scalar_lea.sflag [#allocation10], %s309
        %s311 = sand.u32 %s158, 1
        %s312 = smul.addr %s311, 8
        %s313 = scalar_lea.vmem [#allocation9], %s312
        %v314 = vld [vmem:[%s256] sm:$0xff]
        %v315 = vld [vmem:[%s265] sm:$0xff]
        %v316 = vld [vmem:[%s274] sm:$0xff]
        %v317 = vmul.f32 %v314, 0.17677669
        %vm318 = vcmask 261120
        %v320 = vsel %vm318, %v317, 0
        %v323 = vsel %vm318, %v315, 0
        %325 = vmatprep.subr.mxu0 0.0
        %326 = vmatpush1.xpose.msra.mxu0 %v323
        %327 = vmatprep.subr.mxu0 0.0
        %328 = vmatpush1.xpose.msra.mxu0 0.0
        %329 = vmatprep.subr.mxu0 0.0
        %330 = vmatpush1.xpose.msra.mxu0 0.0
        %331 = vmatprep.subr.mxu0 0.0
        %332 = vmatpush1.xpose.msra.mxu0 0.0
        %333 = vmatprep.subr.mxu0 0.0
        %334 = vmatpush1.xpose.msra.mxu0 0.0
        %335 = vmatprep.subr.mxu0 0.0
        %336 = vmatpush1.xpose.msra.mxu0 0.0
        %337 = vmatprep.subr.mxu0 0.0
        %338 = vmatpush1.xpose.msra.mxu0 0.0
        %339 = vmatprep.subr.mxu0 0.0
        %340 = vmatpush1.xpose.msra.mxu0 0.0
        %341 = vmatprep.subr.mxu0 0.0
        %342 = vmatpush1.xpose.msra.mxu0 0.0
        %343 = vmatprep.subr.mxu0 0.0
        %344 = vmatpush1.xpose.msra.mxu0 0.0
        %345 = vmatprep.subr.mxu0 0.0
        %346 = vmatpush1.xpose.msra.mxu0 0.0
        %347 = vmatprep.subr.mxu0 0.0
        %348 = vmatpush1.xpose.msra.mxu0 0.0
        %349 = vmatprep.subr.mxu0 0.0
        %350 = vmatpush1.xpose.msra.mxu0 0.0
        %351 = vmatprep.subr.mxu0 0.0
        %352 = vmatpush1.xpose.msra.mxu0 0.0
        %353 = vmatprep.subr.mxu0 0.0
        %354 = vmatpush1.xpose.msra.mxu0 0.0
        %355 = vmatprep.subr.mxu0 0.0
        %356 = vmatpush1.xpose.msra.mxu0 0.0
        %357 = vmatprep.subr.mxu0 0.0
        %358 = vmatpush1.xpose.msra.mxu0 0.0
        %359 = vmatprep.subr.mxu0 0.0
        %360 = vmatpush1.xpose.msra.mxu0 0.0
        %361 = vmatprep.subr.mxu0 0.0
        %362 = vmatpush1.xpose.msra.mxu0 0.0
        %363 = vmatprep.subr.mxu0 0.0
        %364 = vmatpush1.xpose.msra.mxu0 0.0
        %365 = vmatprep.subr.mxu0 0.0
        %366 = vmatpush1.xpose.msra.mxu0 0.0
        %367 = vmatprep.subr.mxu0 0.0
        %368 = vmatpush1.xpose.msra.mxu0 0.0
        %369 = vmatprep.subr.mxu0 0.0
        %370 = vmatpush1.xpose.msra.mxu0 0.0
        %371 = vmatprep.subr.mxu0 0.0
        %372 = vmatpush1.xpose.msra.mxu0 0.0
        %373 = vmatprep.subr.mxu0 0.0
        %374 = vmatpush1.xpose.msra.mxu0 0.0
        %375 = vmatprep.subr.mxu0 0.0
        %376 = vmatpush1.xpose.msra.mxu0 0.0
        %377 = vmatprep.subr.mxu0 0.0
        %378 = vmatpush1.xpose.msra.mxu0 0.0
        %379 = vmatprep.subr.mxu0 0.0
        %380 = vmatpush1.xpose.msra.mxu0 0.0
        %381 = vmatprep.subr.mxu0 0.0
        %382 = vmatpush1.xpose.msra.mxu0 0.0
        %383 = vmatprep.subr.mxu0 0.0
        %384 = vmatpush1.xpose.msra.mxu0 0.0
        %385 = vmatprep.subr.mxu0 0.0
        %386 = vmatpush1.xpose.msra.mxu0 0.0
        %387 = vmatprep.subr.mxu0 0.0
        %388 = vmatpush1.xpose.msra.mxu0 0.0
        %389 = vmatprep.mubr.f32.mxu0 0.0
        %390 = vmatmul.mubr.f32.gmra.mrb[0].mxu0 %v320
        %v391 = vpop.f32.mrb[0].mxu0
        %v392 = vadd.f32 0.0, %v391
        %v393 = vpop.f32.mrb[0].mxu0
        %394 = vdwg.mxu0
        %s395 = smul.u32 %s33, 8
        %v396 = vlaneseq
        %v397 = vshrl.u32 %v396, 7
        %v398 = vstv %s395
        %v399 = vadd.s32 %v398, %v397
        %v400 = vlaneseq
        %v401 = vand.u32 %v400, 127
        %vm402 = vcmp.ge.s32.totalorder %v399, %v401
        %v403 = vsel %vm402, %v392, -inf
        %vm404 = vcmask 64512
        %v405 = vsel %vm404, %v403, -inf
        %406 = vmax.xlane.f32.xlu0 %v405
        %v407 = vpop.xlane.xlu0 %406
        %v408 = vsub.f32 %v403, %v407
        %v409 = vmul.f32 %v408, 1.442695
        %v410 = vpow.pop %v409
        %v411 = vsel %vm404, %v410, 0.0
        %412 = vadd.xlane.f32.xlu0 %v411
        %v413 = vpop.xlane.xlu0 %412
        %v414 = vrcp.pop %v413
        %v415 = vmul.f32 %v410, %v414
        %v417 = vsel %vm404, %v415, 0
        %419 = vmatprep.subr.mxu0 0.0
        %420 = vmatpush1.msra.mxu0 %v316
        %421 = vmatprep.subr.mxu0 0.0
        %422 = vmatpush1.msra.mxu0 0.0
        %423 = vmatprep.subr.mxu0 0.0
        %424 = vmatpush1.msra.mxu0 0.0
        %425 = vmatprep.subr.mxu0 0.0
        %426 = vmatpush1.msra.mxu0 0.0
        %427 = vmatprep.subr.mxu0 0.0
        %428 = vmatpush1.msra.mxu0 0.0
        %429 = vmatprep.subr.mxu0 0.0
        %430 = vmatpush1.msra.mxu0 0.0
        %431 = vmatprep.subr.mxu0 0.0
        %432 = vmatpush1.msra.mxu0 0.0
        %433 = vmatprep.subr.mxu0 0.0
        %434 = vmatpush1.msra.mxu0 0.0
        %435 = vmatprep.subr.mxu0 0.0
        %436 = vmatpush1.msra.mxu0 0.0
        %437 = vmatprep.subr.mxu0 0.0
        %438 = vmatpush1.msra.mxu0 0.0
        %439 = vmatprep.subr.mxu0 0.0
        %440 = vmatpush1.msra.mxu0 0.0
        %441 = vmatprep.subr.mxu0 0.0
        %442 = vmatpush1.msra.mxu0 0.0
        %443 = vmatprep.subr.mxu0 0.0
        %444 = vmatpush1.msra.mxu0 0.0
        %445 = vmatprep.subr.mxu0 0.0
        %446 = vmatpush1.msra.mxu0 0.0
        %447 = vmatprep.subr.mxu0 0.0
        %448 = vmatpush1.msra.mxu0 0.0
        %449 = vmatprep.subr.mxu0 0.0
        %450 = vmatpush1.msra.mxu0 0.0
        %451 = vmatprep.subr.mxu0 0.0
        %452 = vmatpush1.msra.mxu0 0.0
        %453 = vmatprep.subr.mxu0 0.0
        %454 = vmatpush1.msra.mxu0 0.0
        %455 = vmatprep.subr.mxu0 0.0
        %456 = vmatpush1.msra.mxu0 0.0
        %457 = vmatprep.subr.mxu0 0.0
        %458 = vmatpush1.msra.mxu0 0.0
        %459 = vmatprep.subr.mxu0 0.0
        %460 = vmatpush1.msra.mxu0 0.0
        %461 = vmatprep.subr.mxu0 0.0
        %462 = vmatpush1.msra.mxu0 0.0
        %463 = vmatprep.subr.mxu0 0.0
        %464 = vmatpush1.msra.mxu0 0.0
        %465 = vmatprep.subr.mxu0 0.0
        %466 = vmatpush1.msra.mxu0 0.0
        %467 = vmatprep.subr.mxu0 0.0
        %468 = vmatpush1.msra.mxu0 0.0
        %469 = vmatprep.subr.mxu0 0.0
        %470 = vmatpush1.msra.mxu0 0.0
        %471 = vmatprep.subr.mxu0 0.0
        %472 = vmatpush1.msra.mxu0 0.0
        %473 = vmatprep.subr.mxu0 0.0
        %474 = vmatpush1.msra.mxu0 0.0
        %475 = vmatprep.subr.mxu0 0.0
        %476 = vmatpush1.msra.mxu0 0.0
        %477 = vmatprep.subr.mxu0 0.0
        %478 = vmatpush1.msra.mxu0 0.0
        %479 = vmatprep.subr.mxu0 0.0
        %480 = vmatpush1.msra.mxu0 0.0
        %481 = vmatprep.subr.mxu0 0.0
        %482 = vmatpush1.msra.mxu0 0.0
        %483 = vmatprep.mubr.f32.mxu0 0.0
        %484 = vmatmul.mubr.f32.gmra.mrb[0].mxu0 %v417
        %v485 = vpop.f32.mrb[0].mxu0
        %v486 = vadd.f32 0.0, %v485
        %v487 = vpop.f32.mrb[0].mxu0
        %488 = vdwg.mxu0
        %489 = vst.msk [vmem:[%s306] sm:$0xff] %vm318, %v486
        %490 = vst.msk [vmem:[%s313] sm:$0xff] %vm404, %v415
        %s491 = sand.u32 %s130, 1
        %s492 = scalar_lea.sflag [#allocation4], %s491
        %s493 = sand.u32 %s130, 1
        %s494 = smul.addr %s493, 8
        %s495 = scalar_lea.vmem [#allocation8], %s494
        %s496 = sand.u32 %s158, 1
        %s497 = scalar_lea.sflag [#allocation10], %s496
        %s498 = sand.u32 %s158, 1
        %s499 = smul.addr %s498, 8
        %s500 = scalar_lea.vmem [#allocation9], %s499
        // Predicated region
        $region45: #{tpu_custom_call.1} parent=31 // pred_check
          %p501 = pneg %p140
        $region46: #{tpu_custom_call.1} parent=31 // pred_check_branch
          %503 = sbr.rel (%p501) target = $region48
        $region47: #{tpu_custom_call.1} parent=31 // pred_region
          %s505 = ssub.s32 128, 128
          %506 = vsyncadd %s492, %s505
          %s507 = sadd.s32 %s33, %s32
          %s508 = smul.addr %s507, 128
          %s509 = scalar_lea.hbm %s3, %s508
          %s511 = sshll.u32 %s495, 4
          %s512 = int_to_ptr.vmem [resolvable:$true] %s511
          %514 = dma.vmem_to_hbm [thread:$0]  %s512, 128, %s509, %s492
        $region48: #{tpu_custom_call.1} parent=31 // pred_fallthru
          _
        // Predicated region
        $region49: #{tpu_custom_call.1} parent=31 // pred_check
          %p515 = pneg %p168
        $region50: #{tpu_custom_call.1} parent=31 // pred_check_branch
          %517 = sbr.rel (%p515) target = $region52
        $region51: #{tpu_custom_call.1} parent=31 // pred_region
          %s519 = ssub.s32 128, 128
          %520 = vsyncadd %s497, %s519
          %s521 = sadd.s32 %s33, %s32
          %s522 = smul.addr %s521, 128
          %s523 = scalar_lea.hbm %s4, %s522
          %s525 = sshll.u32 %s500, 4
          %s526 = int_to_ptr.vmem [resolvable:$true] %s525
          %528 = dma.vmem_to_hbm [thread:$0]  %s526, 128, %s523, %s497
        $region52: #{tpu_custom_call.1} parent=31 // pred_fallthru
          _
      $region32: #{tpu_custom_call.1} parent=5 // pred_fallthru
        _
      %p529 = scmp.le.s32.totalorder 2, %s23
      // Predicated region
      $region53: #{tpu_custom_call.1} parent=5 // pred_check
        %p530 = pneg %p529
      $region54: #{tpu_custom_call.1} parent=5 // pred_check_branch
        %532 = sbr.rel (%p530) target = $region56
      $region55: #{tpu_custom_call.1} parent=5 // pred_region
        %s533 = ssub.s32 %s23, 2
        // Predicated region
        $region57: #{tpu_custom_call.1} parent=55 // pred_check
          %p534 = pneg %p146
        $region58: #{tpu_custom_call.1} parent=55 // pred_check_branch
          %536 = sbr.rel (%p534) target = $region60
        $region59: #{tpu_custom_call.1} parent=55 // pred_region
          %s537 = sand.u32 %s131, 1
          %s538 = scalar_lea.sflag [#allocation4], %s537
          %s539 = sand.u32 %s131, 1
          %s540 = smul.addr %s539, 8
          %s541 = scalar_lea.vmem [#allocation8], %s540
          %542 = dma.done %s538, 128
        $region60: #{tpu_custom_call.1} parent=55 // pred_fallthru
          _
        // Predicated region
        $region61: #{tpu_custom_call.1} parent=55 // pred_check
          %p543 = pneg %p174
        $region62: #{tpu_custom_call.1} parent=55 // pred_check_branch
          %545 = sbr.rel (%p543) target = $region64
        $region63: #{tpu_custom_call.1} parent=55 // pred_region
          %s546 = sand.u32 %s159, 1
          %s547 = scalar_lea.sflag [#allocation10], %s546
          %s548 = sand.u32 %s159, 1
          %s549 = smul.addr %s548, 8
          %s550 = scalar_lea.vmem [#allocation9], %s549
          %551 = dma.done %s547, 128
        $region64: #{tpu_custom_call.1} parent=55 // pred_fallthru
          _
      $region56: #{tpu_custom_call.1} parent=5 // pred_fallthru
        _
    $region6: #{tpu_custom_call.1} parent=1 // loop_footer
      %s27 = sadd.s32 1, %s23
    $region7: #{tpu_custom_call.1} parent=1 // loop_footer_branch
      %22 = sbr.rel target = $region3
    $region8: #{tpu_custom_call.1} parent=1 // loop_exit
      _
    %552 = vsyncpa [#allocation3], 1
    %s553 = scalar_lea.sflag [#allocation3], 1
    %554 = vsyncpa %s553, 1
    %555 = vsyncpa [#allocation6], 1
    %s556 = scalar_lea.sflag [#allocation6], 1
    %557 = vsyncpa %s556, 1
    %558 = vsyncpa [#allocation4], 1
    %s559 = scalar_lea.sflag [#allocation4], 1
    %560 = vsyncpa %s559, 1
    %561 = vsyncpa [#allocation10], 1
    %s562 = scalar_lea.sflag [#allocation10], 1
    %563 = vsyncpa %s562, 1

</llo_original>
